<compile_context>
chip_gen: v5e
topology: v5e:2x2
jax: 0.10.0
libtpu: 0.0.40
codegen_flags: <defaults>
</compile_context>

<pallas_src>
import functools

import jax
import jax.numpy as jnp
from jax import lax
from jax.experimental import pallas as pl
from jax.experimental.pallas import tpu as pltpu


def _round_up(x, m):
    return ((x + m - 1) // m) * m


def _tpu_kind():
    try:
        return jax.devices()[0].device_kind.lower()
    except Exception:
        return ""


def _num_tensorcores():
    # v4 / v5p / v7x expose a 2-TensorCore megacore per device; v5e/v6e are 1 TC.
    kind = _tpu_kind()
    if ("v4" in kind) or ("v5p" in kind) or ("v7" in kind) or ("tpu7" in kind):
        return 2
    return 1


def _supports_bf16_valu():
    # v6e and later have bf16 VALU lanes; older parts legalize via f32 (no win).
    kind = _tpu_kind()
    if not kind:
        return False
    for old in ("v2", "v3", "v4", "v5"):
        if old in kind:
            return False
    return True


def _vmem_budget():
    """Returns (per-call footprint budget, vmem_limit_bytes), portable across gens."""
    cap = None
    try:
        info = pltpu.get_tpu_info()
        cap = getattr(info, "vmem_capacity_bytes", None)
    except Exception:
        cap = None
    if not cap:
        cap = 64 << 20                       # v7x per-TC size: smallest we target
    limit = min((3 * cap) // 4, 48 << 20)    # <= 3/4 physical, <= 48 MiB everywhere
    return limit // 2, limit                 # keep 2x headroom vs. the limit


def _row_split_factor(b, t, in_dtype):
    """Largest k with (b*k) filling sublanes, t % k == 0 and t//k lane-dense."""
    target_rows = 16 if in_dtype == jnp.bfloat16 else 8
    if b >= target_rows:
        return 1
    kmax = max(1, target_rows // b)
    for k in range(kmax, 1, -1):
        if t % k == 0 and (t // k) >= 256:
            return k
    return 1


def _choose_block_t(n_ops, rows, t, in_bytes, vmem_budget, max_block_t):
    # Target ~2 MiB of HBM traffic per grid step so the ~0.35 us fixed per-step
    # overhead is amortized (measured tile sweeps: 29% -> ~85% of HBM roofline).
    target_step_bytes = 2 << 20
    bt = target_step_bytes // max(1, n_ops * rows * in_bytes)
    # VMEM per lane column: double-buffered inputs + the f32 accumulator scratch.
    per_col = 2 * n_ops * rows * in_bytes + 4 * rows
    bt = min(bt, vmem_budget // max(1, per_col))
    if max_block_t is not None:
        bt = min(bt, max_block_t)
    bt = max(128, (bt // 128) * 128)
    if bt >= t:
        return t                              # single full-row tile (full-dim block)
    return bt


def _fused_adv_kernel(*args, centers, inv_t, block_t, total_t, tiles_per_par,
                      needs_mask, math_dtype):
    """One grid step: acc += sum_i (x_i - c_i)^2 for one lane-dense T tile.

    args = (x_ref_0, ..., x_ref_{N-1}, o_ref, acc_ref)
      x_ref_i : (rows, block_t) tile of discriminator output i
      o_ref   : (rows, 1) per parallel-slice partial loss (written at last T step)
      acc_ref : (rows, block_t) f32 lane-dense accumulator (VMEM scratch)
    """
    n = len(centers)
    x_refs = args[:n]
    o_ref = args[n]
    acc_ref = args[n + 1]

    t = pl.program_id(1)

    @pl.when(t == 0)
    def _():
        acc_ref[...] = jnp.zeros_like(acc_ref)

    # Sum of squared (shifted) values across all operands of this group.
    # math_dtype is bf16 on v6e+/bf16 inputs (2x VALU throughput), else f32.
    contrib = None
    for x_ref, c in zip(x_refs, centers):
        x = x_ref[...]
        if x.dtype != math_dtype:
            x = x.astype(math_dtype)
        if c != 0.0:
            x = x - jnp.asarray(c, dtype=math_dtype)
        sq = x * x
        contrib = sq if contrib is None else contrib + sq
    contrib = contrib.astype(jnp.float32)    # single cast before the f32 accumulate

    if needs_mask:
        # Only the tile(s) that overhang the true row length pay the
        # iota + compare + select; every other step is a plain accumulate.
        start = (pl.program_id(0) * tiles_per_par + t) * block_t
        is_tail = start + block_t > total_t

        @pl.when(is_tail)
        def _():
            lane = lax.broadcasted_iota(jnp.int32, acc_ref.shape, 1)
            acc_ref[...] += jnp.where(start + lane < total_t, contrib, 0.0)

        @pl.when(jnp.logical_not(is_tail))
        def _():
            acc_ref[...] += contrib
    else:
        acc_ref[...] += contrib

    @pl.when(t == pl.num_programs(1) - 1)
    def _():
        # Single deferred cross-lane reduce + 1/T scale.
        o_ref[...] = jnp.sum(acc_ref[...], axis=-1, keepdims=True) * jnp.float32(inv_t)


def _fused_group_loss(xs, centers, *, max_block_t=None, n_par_override=None):
    """xs: same-shape, same-dtype (B, T) arrays; centers: matching python floats.

    Returns (B,) f32 = sum_i mean((xs[i] - centers[i])^2, axis=-1).
    """
    b, t = xs[0].shape
    in_dtype = xs[0].dtype
    in_bytes = jnp.dtype(in_dtype).itemsize
    n_ops = len(xs)

    # Small-batch sublane fill: (B, T) -> (B*k, T//k) is a free row-major reshape;
    # each row's mean is recovered by summing its k chunk partials in the wrapper.
    k = _row_split_factor(b, t, in_dtype)
    rows, t_len = b * k, t // k
    if k > 1:
        xs = [x.reshape(rows, t_len) for x in xs]

    vmem_budget, vmem_limit = _vmem_budget()
    block_t = _choose_block_t(n_ops, rows, t_len, in_bytes, vmem_budget, max_block_t)
    n_tiles = -(-t_len // block_t)

    # Split the T-tile range across TensorCores (v7x megacore).  On 1-TC parts
    # a forced split is just an extra cheap outer loop level, so mis-detection
    # is benign; on multi-TC parts the cdiv split never leaves a core idle.
    n_par = _num_tensorcores() if n_par_override is None else int(n_par_override)
    n_par = max(1, min(n_par, n_tiles))
    tiles_per_par = -(-n_tiles // n_par)
    overhang = n_par * tiles_per_par != n_tiles
    needs_mask = overhang or (n_tiles * block_t != t_len)

    if overhang:
        # Last step of the final slice maps past the array; clamp the block
        # index (the kernel's tail mask zeroes its contribution).
        def in_map(p, tt):
            return (0, jnp.minimum(p * tiles_per_par + tt, n_tiles - 1))
    else:
        def in_map(p, tt):
            return (0, p * tiles_per_par + tt)

    math_dtype = (jnp.bfloat16
                  if (in_dtype == jnp.bfloat16 and _supports_bf16_valu())
                  else jnp.float32)

    kernel = functools.partial(
        _fused_adv_kernel,
        centers=tuple(float(c) for c in centers),
        inv_t=1.0 / float(t),
        block_t=block_t,
        total_t=t_len,
        tiles_per_par=tiles_per_par,
        needs_mask=needs_mask,
        math_dtype=math_dtype,
    )

    out = pl.pallas_call(
        kernel,
        out_shape=jax.ShapeDtypeStruct((n_par, rows, 1), jnp.float32),
        grid_spec=pltpu.PrefetchScalarGridSpec(
            num_scalar_prefetch=0,
            grid=(n_par, tiles_per_par),
            in_specs=[pl.BlockSpec((rows, block_t), in_map) for _ in xs],
            out_specs=pl.BlockSpec((pl.Squeezed(), rows, 1),
                                   lambda p, tt: (p, 0, 0)),
            scratch_shapes=[pltpu.VMEM((rows, block_t), jnp.float32)],
        ),
        compiler_params=pltpu.CompilerParams(
            dimension_semantics=("parallel", "arbitrary"),
            vmem_limit_bytes=int(vmem_limit),
        ),
    )(*xs)

    per_row = jnp.sum(out[:, :, 0], axis=0)            # (rows,)
    if k > 1:
        per_row = per_row.reshape(b, k).sum(axis=-1)   # fold the row split back
    return per_row                                      # (B,)


def d_adv_loss(target_out, gen_out, *, min_pallas_bytes=1 << 20,
               max_block_t=None, n_par_override=None):
    """Pallas implementation of DAdvLoss.forward.

    target_out / gen_out: lists of (B, T) arrays (shapes/dtypes may differ
    between entries; entries with the same (shape, dtype) are fused into a
    single pallas_call).  Feeding bf16 discriminator outputs halves the HBM
    bytes of this read-bound reduction.  Returns (B,) f32 loss.
    """
    items = [(x, 1.0) for x in target_out] + [(x, 0.0) for x in gen_out]
    assert items, "DAdvLoss needs at least one discriminator output"

    groups = {}
    for x, c in items:
        key = (tuple(x.shape), jnp.dtype(x.dtype).name)
        groups.setdefault(key, []).append((x, c))

    total = None
    for members in groups.values():
        xs = [x for x, _ in members]
        cs = [c for _, c in members]
        group_bytes = sum(int(x.size) * x.dtype.itemsize for x in xs)
        if group_bytes < min_pallas_bytes:
            # Launch + pipeline warm-up dominates tiny groups; let XLA fuse them.
            part = sum(jnp.mean((x.astype(jnp.float32) - c) ** 2, axis=-1)
                       for x, c in members)
        else:
            part = _fused_group_loss(xs, cs, max_block_t=max_block_t,
                                     n_par_override=n_par_override)
        total = part if total is None else total + part
    return total


def _reference(target_out, gen_out):
    tl = sum(jnp.mean((o.astype(jnp.float32) - 1.0) ** 2, axis=-1) for o in target_out)
    gl = sum(jnp.mean(o.astype(jnp.float32) ** 2, axis=-1) for o in gen_out)
    return tl + gl


if __name__ == "__main__":
    key = jax.random.PRNGKey(0)
    B = 2
    # Multi-scale / multi-period style outputs: three shape groups, one odd one.
    target_shapes = [(B, 1024), (B, 1024), (B, 768)]
    gen_shapes = [(B, 1024), (B, 768), (B, 640)]

    keys = jax.random.split(key, len(target_shapes) + len(gen_shapes))
    target_out = [jax.random.normal(keys[i], s, dtype=jnp.float32)
                  for i, s in enumerate(target_shapes)]
    gen_out = [jax.random.normal(keys[len(target_shapes) + j], s, dtype=jnp.float32)
               for j, s in enumerate(gen_shapes)]

    ref = _reference(target_out, gen_out)

    # 1) Forced Pallas path, small tiles + forced 2-way split: exercises T tiling,
    #    the partial-tail mask, the odd-tile-count (clamped overhang) split, and
    #    the small-batch row splitting.
    loss = jax.block_until_ready(
        d_adv_loss(target_out, gen_out, min_pallas_bytes=0,
                   max_block_t=128, n_par_override=2))
    assert loss.shape == (B,)
    assert jnp.allclose(loss, ref, atol=1e-5, rtol=1e-5), (loss, ref)

    # 2) Forced Pallas path with default byte-budgeted tiles and auto core split.
    loss2 = jax.block_until_ready(d_adv_loss(target_out, gen_out, min_pallas_bytes=0))
    assert jnp.allclose(loss2, ref, atol=1e-5, rtol=1e-5), (loss2, ref)

    # 3) Default thresholds: these tiny groups fall back to the fused XLA path.
    loss3 = jax.block_until_ready(d_adv_loss(target_out, gen_out))
    assert jnp.allclose(loss3, ref, atol=1e-5, rtol=1e-5), (loss3, ref)

    # 4) bf16 inputs: half the HBM read bytes; bf16 VALU math on v6e+ (auto),
    #    f32 accumulation either way.
    target_bf16 = [x.astype(jnp.bfloat16) for x in target_out]
    gen_bf16 = [x.astype(jnp.bfloat16) for x in gen_out]
    loss_bf16 = jax.block_until_ready(
        d_adv_loss(target_bf16, gen_bf16, min_pallas_bytes=0))
    ref_bf16 = _reference(target_bf16, gen_bf16)
    assert jnp.allclose(loss_bf16, ref_bf16, atol=1e-2, rtol=1e-2), (loss_bf16, ref_bf16)

    print("KERNEL_OK")
</pallas_src>

<mosaic_0001>
module attributes {stable_mosaic.version = 11 : i64} {
  func.func @_fused_adv_kernel(%arg0: i32, %arg1: i32, %arg2: memref<8x128xf32, #tpu.memory_space<vmem>>, %arg3: memref<8x128xf32, #tpu.memory_space<vmem>>, %arg4: memref<8x128xf32, #tpu.memory_space<vmem>>, %arg5: memref<1x8x1xf32, #tpu.memory_space<vmem>>, %arg6: memref<8x128xf32, #tpu.memory_space<vmem>>) attributes {dimension_semantics = [#tpu.dimension_semantics<parallel>, #tpu.dimension_semantics<arbitrary>], iteration_bounds = array<i64: 2, 1>, scalar_prefetch = 0 : i64, scratch_operands = 1 : i64, tpu.core_type = #tpu.core_type<tc>, window_params = [{transform_indices = @transform_0, window_bounds = array<i64: 8, 128>}, {transform_indices = @transform_1, window_bounds = array<i64: 8, 128>}, {transform_indices = @transform_2, window_bounds = array<i64: 8, 128>}, {transform_indices = @transform_3, window_bounds = array<i64: 1, 8, 1>}]} {
    %c0_i32 = arith.constant 0 : i32
    %0 = arith.cmpi eq, %arg1, %c0_i32 : i32
    %1 = arith.extui %0 : i1 to i32
    %c0_i32_0 = arith.constant 0 : i32
    %2 = arith.cmpi ne, %1, %c0_i32_0 : i32
    scf.if %2 {
      %cst_13 = arith.constant 0.000000e+00 : f32
      %21 = vector.broadcast %cst_13 : f32 to vector<8x128xf32>
      %c0_14 = arith.constant 0 : index
      %c0_15 = arith.constant 0 : index
      %22 = vector.load %arg6[%c0_14, %c0_15] : memref<8x128xf32, #tpu.memory_space<vmem>>, vector<8x128xf32>
      tpu.vector_store %arg6[%c0_14, %c0_15], %21 {strides = array<i32>} : memref<8x128xf32, #tpu.memory_space<vmem>>, vector<8x128xf32>,
    } else {
    }
    %c0 = arith.constant 0 : index
    %c0_1 = arith.constant 0 : index
    %3 = vector.load %arg2[%c0, %c0_1] : memref<8x128xf32, #tpu.memory_space<vmem>>, vector<8x128xf32>
    %cst = arith.constant 1.000000e+00 : f32
    %4 = vector.broadcast %cst : f32 to vector<8x128xf32>
    %5 = arith.subf %3, %4 : vector<8x128xf32>
    %6 = arith.mulf %5, %5 : vector<8x128xf32>
    %c0_2 = arith.constant 0 : index
    %c0_3 = arith.constant 0 : index
    %7 = vector.load %arg3[%c0_2, %c0_3] : memref<8x128xf32, #tpu.memory_space<vmem>>, vector<8x128xf32>
    %cst_4 = arith.constant 1.000000e+00 : f32
    %8 = vector.broadcast %cst_4 : f32 to vector<8x128xf32>
    %9 = arith.subf %7, %8 : vector<8x128xf32>
    %10 = arith.mulf %9, %9 : vector<8x128xf32>
    %11 = arith.addf %6, %10 : vector<8x128xf32>
    %c0_5 = arith.constant 0 : index
    %c0_6 = arith.constant 0 : index
    %12 = vector.load %arg4[%c0_5, %c0_6] : memref<8x128xf32, #tpu.memory_space<vmem>>, vector<8x128xf32>
    %13 = arith.mulf %12, %12 : vector<8x128xf32>
    %14 = arith.addf %11, %13 : vector<8x128xf32>
    %c0_7 = arith.constant 0 : index
    %c0_8 = arith.constant 0 : index
    %15 = vector.load %arg6[%c0_7, %c0_8] : memref<8x128xf32, #tpu.memory_space<vmem>>, vector<8x128xf32>
    %16 = arith.addf %15, %14 : vector<8x128xf32>
    %c0_9 = arith.constant 0 : index
    %c0_10 = arith.constant 0 : index
    %17 = vector.load %arg6[%c0_9, %c0_10] : memref<8x128xf32, #tpu.memory_space<vmem>>, vector<8x128xf32>
    tpu.vector_store %arg6[%c0_9, %c0_10], %16 {strides = array<i32>} : memref<8x128xf32, #tpu.memory_space<vmem>>, vector<8x128xf32>,
    %c0_i32_11 = arith.constant 0 : i32
    %18 = arith.cmpi eq, %arg1, %c0_i32_11 : i32
    %19 = arith.extui %18 : i1 to i32
    %c0_i32_12 = arith.constant 0 : i32
    %20 = arith.cmpi ne, %19, %c0_i32_12 : i32
    scf.if %20 {
      %c0_13 = arith.constant 0 : index
      %c0_14 = arith.constant 0 : index
      %21 = vector.load %arg6[%c0_13, %c0_14] : memref<8x128xf32, #tpu.memory_space<vmem>>, vector<8x128xf32>
      %cst_15 = arith.constant dense<0.000000e+00> : vector<8xf32>
      %22 = vector.multi_reduction <add>, %21, %cst_15 [1] : vector<8x128xf32> to vector<8xf32>
      %23 = vector.shape_cast %22 : vector<8xf32> to vector<8x1xf32>
      %cst_16 = arith.constant 9.765625E-4 : f32
      %24 = vector.broadcast %cst_16 : f32 to vector<8x1xf32>
      %25 = arith.mulf %23, %24 : vector<8x1xf32>
      %c0_17 = arith.constant 0 : index
      %c0_18 = arith.constant 0 : index
      %c0_19 = arith.constant 0 : index
      %26 = vector.load %arg5[%c0_17, %c0_18, %c0_19] : memref<1x8x1xf32, #tpu.memory_space<vmem>>, vector<1x8x1xf32>
      %27 = vector.shape_cast %26 : vector<1x8x1xf32> to vector<8x1xf32>
      %28 = vector.shape_cast %25 : vector<8x1xf32> to vector<1x8x1xf32>
      tpu.vector_store %arg5[%c0_17, %c0_18, %c0_19], %28 {strides = array<i32>} : memref<1x8x1xf32, #tpu.memory_space<vmem>>, vector<1x8x1xf32>,
    } else {
    }
    return
  }
  func.func @transform_0(%arg0: i32, %arg1: i32) -> (i32, i32) {
    %c1_i32 = arith.constant 1 : i32
    %0 = arith.muli %arg0, %c1_i32 : i32
    %1 = arith.addi %0, %arg1 : i32
    %c0_i32 = arith.constant 0 : i32
    %c0_i32_0 = arith.constant 0 : i32
    return %c0_i32, %1 : i32, i32
  }
  func.func @transform_1(%arg0: i32, %arg1: i32) -> (i32, i32) {
    %c1_i32 = arith.constant 1 : i32
    %0 = arith.muli %arg0, %c1_i32 : i32
    %1 = arith.addi %0, %arg1 : i32
    %c0_i32 = arith.constant 0 : i32
    %c0_i32_0 = arith.constant 0 : i32
    return %c0_i32, %1 : i32, i32
  }
  func.func @transform_2(%arg0: i32, %arg1: i32) -> (i32, i32) {
    %c1_i32 = arith.constant 1 : i32
    %0 = arith.muli %arg0, %c1_i32 : i32
    %1 = arith.addi %0, %arg1 : i32
    %c0_i32 = arith.constant 0 : i32
    %c0_i32_0 = arith.constant 0 : i32
    return %c0_i32, %1 : i32, i32
  }
  func.func @transform_3(%arg0: i32, %arg1: i32) -> (i32, i32, i32) {
    %c0_i32 = arith.constant 0 : i32
    %c0_i32_0 = arith.constant 0 : i32
    %c0_i32_1 = arith.constant 0 : i32
    return %arg0, %c0_i32, %c0_i32_0 : i32, i32, i32
  }
}

</mosaic_0001>

<llo_original>
// kernel: tpu_custom_call.1
$region0: #{tpu_custom_call.1}
  #allocation0 [shape = 'u32[]', space=smem, size = 0x4, offset = 0x4, fixed_abs, tag = 'smem constant byte address 0x4 - core index']
  #allocation1 [shape = 'u32[72,128]{1,0:T(1,128)}', space=vmem, size = 0x9000, scoped, tag = 'internal scratch']
  #allocation2 [shape = 'f32[8,128]{1,0:T(8,128)}', space=vmem, size = 0x1000, scoped, tag = 'scratch operand']
  %s0 = inlined_call_operand.hbm [shape: f32[8,256], index: 0, kind: input, shape index: {}]
  %s1 = inlined_call_operand.hbm [shape: f32[8,256], index: 1, kind: input, shape index: {}]
  %s2 = inlined_call_operand.hbm [shape: f32[8,256], index: 2, kind: input, shape index: {}]
  %s3 = inlined_call_operand.vmem [shape: f32[2,8,1], index: 3, kind: output, shape index: {}]
  %s4 = sld [smem:[#allocation0]]
  $region65: #{tpu_custom_call.1} parent=0
    _
  %s6 = ssub.s32 1, %s4
  %s7 = scalar_select 0, %s6, %s4
  $region1: #{tpu_custom_call.1} parent=0
    #allocation3 [shape = 'u8[8192]{0}', space=vmem, size = 0x2000, scoped, tag = 'input window, operand 0']
    #allocation4 [shape = 's32[2]{0}', space=sflag, size = 0x8, scoped, tag = 'scoped memory for tpu_custom_call.1']
    #allocation5 [shape = 'u8[8192]{0}', space=vmem, size = 0x2000, scoped, tag = 'input window, operand 1']
    #allocation6 [shape = 's32[2]{0}', space=sflag, size = 0x8, scoped, tag = 'scoped memory for tpu_custom_call.1']
    #allocation7 [shape = 'u8[8192]{0}', space=vmem, size = 0x2000, scoped, tag = 'input window, operand 2']
    %8 = vsyncpa [#allocation4], 0
    %s9 = scalar_lea.sflag [#allocation4], 1
    %10 = vsyncpa %s9, 0
    %11 = vsyncpa [#allocation6], 0
    %s12 = scalar_lea.sflag [#allocation6], 1
    %13 = vsyncpa %s12, 0
    loop: start=0, step=1, limit=4
    $region2: #{tpu_custom_call.1} parent=1 // loop_pre_header
      _
    $region3: #{tpu_custom_call.1} parent=1 // loop_header
      %s15 = sphi 0, %s19
      %p16 = scmp.ge.s32.totalorder %s15, 4
      %s22 = sphi 0, %s34
      %s23 = sphi 0, %s30
      %s24 = sphi 0, %s22
      %s25 = sphi 0, %s23
      %s26 = sphi 0, %s24
      %s27 = sphi 0, %s25
      %s39 = sphi 0, %s41
      %s42 = sphi 0, %s39
      %s43 = sphi 0, %s42
      %s59 = sphi 0, %s43
      %s67 = sphi 0, %s69
      %s70 = sphi 0, %s67
      %s71 = sphi 0, %s70
      %s87 = sphi 0, %s71
      %s95 = sphi 0, %s97
      %s98 = sphi 0, %s95
      %s99 = sphi 0, %s98
      %s115 = sphi 0, %s99
      %s121 = sphi 0, %s123
      %s124 = sphi 0, %s121
      %s125 = sphi 0, %s124
      %s141 = sphi 0, %s125
    $region4: #{tpu_custom_call.1} parent=1 // loop_header_branch
      %18 = sbr.rel (%p16) target = $region8
    $region5: #{tpu_custom_call.1} parent=1 // loop_body
      %s20 = ssub.s32 %s15, 1
      %s21 = ssub.s32 %s15, 2
      %s28 = sadd.s32 1, %s23
      %p29 = scmp.ge.s32.totalorder %s28, 1
      %s30 = scalar_select %p29, 0, %s28
      %s31 = sadd.s32 1, %s22
      %s32 = scalar_select %p29, %s31, %s22
      %p33 = scmp.ge.s32.totalorder %s32, 2
      %s34 = scalar_select %p33, 0, %s32
      %s35 = sadd.s32 %s22, %s23
      %s36 = sadd.s32 %s34, %s30
      %s37 = ssub.s32 %s35, %s36
      %p38 = scmp.eq.s32.totalorder %s37, 0
      %s40 = sadd.s32 %s39, 1
      %s41 = scalar_select %p38, %s39, %s40
      %p44 = pneg %p38
      %p45 = scmp.eq.s32.totalorder %s15, 1
      %p46 = por %p44, %p45
      %p47 = scmp.ne.s32.totalorder %s39, %s42
      %p48 = scmp.eq.s32.totalorder %s15, 0
      %p49 = por %p47, %p48
      %p50 = scmp.ne.s32.totalorder %s39, %s42
      %p51 = scmp.eq.s32.totalorder %s20, 1
      %p52 = por %p50, %p51
      %p53 = scmp.ne.s32.totalorder %s42, %s43
      %p54 = scmp.eq.s32.totalorder %s20, 0
      %p55 = por %p53, %p54
      %p56 = scmp.ne.s32.totalorder %s42, %s43
      %p57 = scmp.eq.s32.totalorder %s21, 1
      %p58 = por %p56, %p57
      %p60 = scmp.ne.s32.totalorder %s43, %s59
      %p61 = scmp.eq.s32.totalorder %s21, 0
      %p62 = por %p60, %p61
      %s63 = sadd.s32 %s22, %s23
      %s64 = sadd.s32 %s34, %s30
      %s65 = ssub.s32 %s63, %s64
      %p66 = scmp.eq.s32.totalorder %s65, 0
      %s68 = sadd.s32 %s67, 1
      %s69 = scalar_select %p66, %s67, %s68
      %p72 = pneg %p66
      %p73 = scmp.eq.s32.totalorder %s15, 1
      %p74 = por %p72, %p73
      %p75 = scmp.ne.s32.totalorder %s67, %s70
      %p76 = scmp.eq.s32.totalorder %s15, 0
      %p77 = por %p75, %p76
      %p78 = scmp.ne.s32.totalorder %s67, %s70
      %p79 = scmp.eq.s32.totalorder %s20, 1
      %p80 = por %p78, %p79
      %p81 = scmp.ne.s32.totalorder %s70, %s71
      %p82 = scmp.eq.s32.totalorder %s20, 0
      %p83 = por %p81, %p82
      %p84 = scmp.ne.s32.totalorder %s70, %s71
      %p85 = scmp.eq.s32.totalorder %s21, 1
      %p86 = por %p84, %p85
      %p88 = scmp.ne.s32.totalorder %s71, %s87
      %p89 = scmp.eq.s32.totalorder %s21, 0
      %p90 = por %p88, %p89
      %s91 = sadd.s32 %s22, %s23
      %s92 = sadd.s32 %s34, %s30
      %s93 = ssub.s32 %s91, %s92
      %p94 = scmp.eq.s32.totalorder %s93, 0
      %s96 = sadd.s32 %s95, 1
      %s97 = scalar_select %p94, %s95, %s96
      %p100 = pneg %p94
      %p101 = scmp.eq.s32.totalorder %s15, 1
      %p102 = por %p100, %p101
      %p103 = scmp.ne.s32.totalorder %s95, %s98
      %p104 = scmp.eq.s32.totalorder %s15, 0
      %p105 = por %p103, %p104
      %p106 = scmp.ne.s32.totalorder %s95, %s98
      %p107 = scmp.eq.s32.totalorder %s20, 1
      %p108 = por %p106, %p107
      %p109 = scmp.ne.s32.totalorder %s98, %s99
      %p110 = scmp.eq.s32.totalorder %s20, 0
      %p111 = por %p109, %p110
      %p112 = scmp.ne.s32.totalorder %s98, %s99
      %p113 = scmp.eq.s32.totalorder %s21, 1
      %p114 = por %p112, %p113
      %p116 = scmp.ne.s32.totalorder %s99, %s115
      %p117 = scmp.eq.s32.totalorder %s21, 0
      %p118 = por %p116, %p117
      %s119 = ssub.s32 %s22, %s34
      %p120 = scmp.eq.s32.totalorder %s119, 0
      %s122 = sadd.s32 %s121, 1
      %s123 = scalar_select %p120, %s121, %s122
      %p126 = pneg %p120
      %p127 = scmp.eq.s32.totalorder %s15, 1
      %p128 = por %p126, %p127
      %p129 = scmp.ne.s32.totalorder %s121, %s124
      %p130 = scmp.eq.s32.totalorder %s15, 0
      %p131 = por %p129, %p130
      %p132 = scmp.ne.s32.totalorder %s121, %s124
      %p133 = scmp.eq.s32.totalorder %s20, 1
      %p134 = por %p132, %p133
      %p135 = scmp.ne.s32.totalorder %s124, %s125
      %p136 = scmp.eq.s32.totalorder %s20, 0
      %p137 = por %p135, %p136
      %p138 = scmp.ne.s32.totalorder %s124, %s125
      %p139 = scmp.eq.s32.totalorder %s21, 1
      %p140 = por %p138, %p139
      %p142 = scmp.ne.s32.totalorder %s125, %s141
      %p143 = scmp.eq.s32.totalorder %s21, 0
      %p144 = por %p142, %p143
      %p145 = scmp.le.s32.totalorder 1, %s15
      %p146 = scmp.lt.s32.totalorder %s15, 3
      %p147 = pnand %p145, %p146
      %p148 = pneg %p147
      // Predicated region
      $region9: #{tpu_custom_call.1} parent=5 // pred_check
        _
      $region10: #{tpu_custom_call.1} parent=5 // pred_check_branch
        %150 = sbr.rel (%p147) target = $region12
      $region11: #{tpu_custom_call.1} parent=5 // pred_region
        %s151 = ssub.s32 %s15, 1
      $region12: #{tpu_custom_call.1} parent=5 // pred_fallthru
        _
      %p152 = scmp.lt.s32.totalorder %s15, 2
      // Predicated region
      $region13: #{tpu_custom_call.1} parent=5 // pred_check
        %p153 = pneg %p152
      $region14: #{tpu_custom_call.1} parent=5 // pred_check_branch
        %155 = sbr.rel (%p153) target = $region16
      $region15: #{tpu_custom_call.1} parent=5 // pred_region
        // Predicated region
        $region17: #{tpu_custom_call.1} parent=15 // pred_check
          %p156 = pneg %p49
        $region18: #{tpu_custom_call.1} parent=15 // pred_check_branch
          %158 = sbr.rel (%p156) target = $region20
        $region19: #{tpu_custom_call.1} parent=15 // pred_region
          %s159 = sand.u32 %s39, 1
          %s160 = scalar_lea.sflag [#allocation4], %s159
          %s161 = sand.u32 %s39, 1
          %s162 = smul.addr %s161, 8
          %s163 = scalar_lea.vmem [#allocation3], %s162
          %s164 = sadd.s32 %s22, %s23
          %166 = vsyncadd %s160, 0
          %s167 = smul.addr %s164, 8
          %s168 = scalar_lea.hbm %s0, %s167
          %s170 = sshll.u32 %s168, 4
          %s171 = int_to_ptr.hbm [resolvable:$true] %s170
          %s172 = sshll.u32 %s163, 4
          %s173 = int_to_ptr.vmem [resolvable:$true] %s172
          %175 = dma.hbm_to_vmem [thread:$0]  %s171, 128, %s173, %s160
        $region20: #{tpu_custom_call.1} parent=15 // pred_fallthru
          _
        // Predicated region
        $region21: #{tpu_custom_call.1} parent=15 // pred_check
          %p176 = pneg %p77
        $region22: #{tpu_custom_call.1} parent=15 // pred_check_branch
          %178 = sbr.rel (%p176) target = $region24
        $region23: #{tpu_custom_call.1} parent=15 // pred_region
          %s179 = sand.u32 %s15, 1
          %s180 = scalar_lea.sflag [#allocation6], %s179
          %s181 = sand.u32 %s67, 1
          %s182 = smul.addr %s181, 8
          %s183 = scalar_lea.vmem [#allocation5], %s182
          %s184 = sadd.s32 %s22, %s23
          %186 = vsyncadd %s180, 0
          %s187 = smul.addr %s184, 8
          %s188 = scalar_lea.hbm %s1, %s187
          %s190 = sshll.u32 %s188, 4
          %s191 = int_to_ptr.hbm [resolvable:$true] %s190
          %s192 = sshll.u32 %s183, 4
          %s193 = int_to_ptr.vmem [resolvable:$true] %s192
          %195 = dma.hbm_to_vmem [thread:$0]  %s191, 128, %s193, %s180
        $region24: #{tpu_custom_call.1} parent=15 // pred_fallthru
          _
        // Predicated region
        $region25: #{tpu_custom_call.1} parent=15 // pred_check
          %p196 = pneg %p105
        $region26: #{tpu_custom_call.1} parent=15 // pred_check_branch
          %198 = sbr.rel (%p196) target = $region28
        $region27: #{tpu_custom_call.1} parent=15 // pred_region
          %s199 = sand.u32 %s15, 1
          %s200 = scalar_lea.sflag [#allocation6], %s199
          %s201 = sand.u32 %s95, 1
          %s202 = smul.addr %s201, 8
          %s203 = scalar_lea.vmem [#allocation7], %s202
          %s204 = sadd.s32 %s22, %s23
          %206 = vsyncadd %s200, 0
          %s207 = smul.addr %s204, 8
          %s208 = scalar_lea.hbm %s2, %s207
          %s210 = sshll.u32 %s208, 4
          %s211 = int_to_ptr.hbm [resolvable:$true] %s210
          %s212 = sshll.u32 %s203, 4
          %s213 = int_to_ptr.vmem [resolvable:$true] %s212
          %215 = dma.hbm_to_vmem [thread:$0]  %s211, 128, %s213, %s200
        $region28: #{tpu_custom_call.1} parent=15 // pred_fallthru
          _
      $region16: #{tpu_custom_call.1} parent=5 // pred_fallthru
        _
      %p216 = scmp.le.s32.totalorder 1, %s15
      %p217 = scmp.lt.s32.totalorder %s15, 3
      %p218 = pnand %p216, %p217
      %p219 = pneg %p218
      // Predicated region
      $region29: #{tpu_custom_call.1} parent=5 // pred_check
        _
      $region30: #{tpu_custom_call.1} parent=5 // pred_check_branch
        %221 = sbr.rel (%p218) target = $region32
      $region31: #{tpu_custom_call.1} parent=5 // pred_region
        %s222 = ssub.s32 %s15, 1
        %s223 = sand.u32 %s42, 1
        %s224 = scalar_lea.sflag [#allocation4], %s223
        %s225 = sand.u32 %s42, 1
        %s226 = smul.addr %s225, 8
        %s227 = scalar_lea.vmem [#allocation3], %s226
        // Predicated region
        $region33: #{tpu_custom_call.1} parent=31 // pred_check
          %p228 = pneg %p55
        $region34: #{tpu_custom_call.1} parent=31 // pred_check_branch
          %230 = sbr.rel (%p228) target = $region36
        $region35: #{tpu_custom_call.1} parent=31 // pred_region
          %232 = dma.done %s224, 128
        $region36: #{tpu_custom_call.1} parent=31 // pred_fallthru
          _
        %s233 = sand.u32 %s20, 1
        %s234 = scalar_lea.sflag [#allocation6], %s233
        %s235 = sand.u32 %s70, 1
        %s236 = smul.addr %s235, 8
        %s237 = scalar_lea.vmem [#allocation5], %s236
        // Predicated region
        $region37: #{tpu_custom_call.1} parent=31 // pred_check
          %p238 = pneg %p83
        $region38: #{tpu_custom_call.1} parent=31 // pred_check_branch
          %240 = sbr.rel (%p238) target = $region40
        $region39: #{tpu_custom_call.1} parent=31 // pred_region
          %242 = dma.done %s234, 128
        $region40: #{tpu_custom_call.1} parent=31 // pred_fallthru
          _
        %s243 = sand.u32 %s20, 1
        %s244 = scalar_lea.sflag [#allocation6], %s243
        %s245 = sand.u32 %s98, 1
        %s246 = smul.addr %s245, 8
        %s247 = scalar_lea.vmem [#allocation7], %s246
        // Predicated region
        $region41: #{tpu_custom_call.1} parent=31 // pred_check
          %p248 = pneg %p111
        $region42: #{tpu_custom_call.1} parent=31 // pred_check_branch
          %250 = sbr.rel (%p248) target = $region44
        $region43: #{tpu_custom_call.1} parent=31 // pred_region
          %252 = dma.done %s244, 128
        $region44: #{tpu_custom_call.1} parent=31 // pred_fallthru
          _
        %s253 = sand.u32 %s42, 1
        %s254 = scalar_lea.sflag [#allocation4], %s253
        %s255 = sand.u32 %s42, 1
        %s256 = smul.addr %s255, 8
        %s257 = scalar_lea.vmem [#allocation3], %s256
        %p258 = pneg %p55
        %p259 = pneg %p52
        %s260 = sand.u32 %s20, 1
        %s261 = scalar_lea.sflag [#allocation6], %s260
        %s262 = sand.u32 %s70, 1
        %s263 = smul.addr %s262, 8
        %s264 = scalar_lea.vmem [#allocation5], %s263
        %p265 = pneg %p83
        %p266 = pneg %p80
        %s267 = sand.u32 %s20, 1
        %s268 = scalar_lea.sflag [#allocation6], %s267
        %s269 = sand.u32 %s98, 1
        %s270 = smul.addr %s269, 8
        %s271 = scalar_lea.vmem [#allocation7], %s270
        %p272 = pneg %p111
        %p273 = pneg %p108
        %p274 = pneg %p137
        %p275 = pneg %p134
        %p276 = scmp.lt.s32.totalorder %s24, 1
        %s277 = scalar_select %p276, %s24, 1
        %s278 = smul.addr %s277, 8
        %s279 = scalar_lea.vmem %s3, %s278
        %s280 = sadd.s32 %s24, %s25
        %s281 = sadd.s32 %s24, %s25
        %s282 = sadd.s32 %s24, %s25
        %p283 = scmp.lt.s32.totalorder %s24, 1
        %s284 = scalar_select %p283, %s24, 1
        %s285 = smul.addr %s284, 8
        %s286 = scalar_lea.vmem %s3, %s285
        %p287 = scmp.eq.s32.totalorder %s25, 0
        // Predicated region
        $region45: #{tpu_custom_call.1} parent=31 // pred_check
          %p288 = pneg %p287
        $region46: #{tpu_custom_call.1} parent=31 // pred_check_branch
          %290 = sbr.rel (%p288) target = $region48
        $region47: #{tpu_custom_call.1} parent=31 // pred_region
          %291 = vst [vmem:[#allocation2] sm:$0xff] 0.0
        $region48: #{tpu_custom_call.1} parent=31 // pred_fallthru
          _
        %v292 = vld [vmem:[%s227] sm:$0xff]
        %v293 = vsub.f32 %v292, 1.0
        %v294 = vmul.f32 %v293, %v293
        %v295 = vld [vmem:[%s237] sm:$0xff]
        %v296 = vsub.f32 %v295, 1.0
        %v297 = vmul.f32 %v296, %v296
        %v298 = vadd.f32 %v294, %v297
        %v299 = vld [vmem:[%s247] sm:$0xff]
        %v300 = vmul.f32 %v299, %v299
        %v301 = vadd.f32 %v298, %v300
        %v302 = vld [vmem:[#allocation2] sm:$0xff]
        %v303 = vadd.f32 %v302, %v301
        %304 = vst [vmem:[#allocation2] sm:$0xff] %v303
        // Predicated region
        $region49: #{tpu_custom_call.1} parent=31 // pred_check
          %p305 = pneg %p287
        $region50: #{tpu_custom_call.1} parent=31 // pred_check_branch
          %307 = sbr.rel (%p305) target = $region52
        $region51: #{tpu_custom_call.1} parent=31 // pred_region
          %v308 = vld [vmem:[#allocation2] sm:$0xff]
          %309 = vadd.xlane.f32.xlu0 %v308
          %v310 = vpop.xlane.xlu0 %309
          %v311 = vmul.f32 %v310, 0.0009765625
          %vm312 = vcmask 7168
          %313 = vst.msk [vmem:[%s286] sm:$0xff] %vm312, %v311
        $region52: #{tpu_custom_call.1} parent=31 // pred_fallthru
          _
        %p314 = scmp.lt.s32.totalorder %s24, 1
        %s315 = scalar_select %p314, %s24, 1
        %s316 = smul.addr %s315, 8
        %s317 = scalar_lea.vmem %s3, %s316
        // Predicated region
        $region53: #{tpu_custom_call.1} parent=31 // pred_check
          %p318 = pneg %p134
        $region54: #{tpu_custom_call.1} parent=31 // pred_check_branch
          %320 = sbr.rel (%p318) target = $region56
        $region55: #{tpu_custom_call.1} parent=31 // pred_region
          _
        $region56: #{tpu_custom_call.1} parent=31 // pred_fallthru
          _
      $region32: #{tpu_custom_call.1} parent=5 // pred_fallthru
        _
      %p321 = scmp.le.s32.totalorder 2, %s15
      // Predicated region
      $region57: #{tpu_custom_call.1} parent=5 // pred_check
        %p322 = pneg %p321
      $region58: #{tpu_custom_call.1} parent=5 // pred_check_branch
        %324 = sbr.rel (%p322) target = $region60
      $region59: #{tpu_custom_call.1} parent=5 // pred_region
        %s325 = ssub.s32 %s15, 2
        // Predicated region
        $region61: #{tpu_custom_call.1} parent=59 // pred_check
          %p326 = pneg %p140
        $region62: #{tpu_custom_call.1} parent=59 // pred_check_branch
          %328 = sbr.rel (%p326) target = $region64
        $region63: #{tpu_custom_call.1} parent=59 // pred_region
          %p329 = scmp.lt.s32.totalorder %s26, 1
          %s330 = scalar_select %p329, %s26, 1
          %s331 = smul.addr %s330, 8
          %s332 = scalar_lea.vmem %s3, %s331
        $region64: #{tpu_custom_call.1} parent=59 // pred_fallthru
          _
      $region60: #{tpu_custom_call.1} parent=5 // pred_fallthru
        _
    $region6: #{tpu_custom_call.1} parent=1 // loop_footer
      %s19 = sadd.s32 1, %s15
    $region7: #{tpu_custom_call.1} parent=1 // loop_footer_branch
      %14 = sbr.rel target = $region3
    $region8: #{tpu_custom_call.1} parent=1 // loop_exit
      _
    %333 = vsyncpa [#allocation4], 1
    %s334 = scalar_lea.sflag [#allocation4], 1
    %335 = vsyncpa %s334, 1
    %336 = vsyncpa [#allocation6], 1
    %s337 = scalar_lea.sflag [#allocation6], 1
    %338 = vsyncpa %s337, 1

</llo_original>
